<compile_context>
chip_gen: v5e
topology: v5e:2x2
jax: 0.10.0
libtpu: 0.0.40
codegen_flags: <defaults>
</compile_context>

<pallas_src>
import functools

import jax
import jax.numpy as jnp
from jax import lax
from jax.experimental import pallas as pl
from jax.experimental.pallas import tpu as pltpu

EPS = 1e-5


# --------------------------- host-side weight prep ---------------------------
def _banded_conv3x3(w_hwio, win, wout, stride, dtype):
    """Banded weights for a 3x3 'same' conv in packed-row layout.

    w_hwio: (3, 3, cin, cout).  Returns (3, win*cin, wout*cout) where slice dy
    maps a packed input row (win*cin lanes) to a packed output row, folding in
    the 3 horizontal taps and the horizontal zero padding (pad=1) and the
    horizontal stride.
    """
    kh, kw, cin, cout = w_hwio.shape
    p = jnp.arange(win)[:, None, None]          # input spatial column
    xo = jnp.arange(wout)[None, :, None]        # output spatial column
    dx = jnp.arange(kw)[None, None, :]          # horizontal tap
    mask = (p == stride * xo + dx - 1).astype(jnp.float32)      # (win, wout, kw)
    b = jnp.einsum("pod,ydic->ypioc", mask, w_hwio.astype(jnp.float32))
    return b.reshape(kh, win * cin, wout * cout).astype(dtype)


def _banded_conv1x1(ws_io, win, wout, stride, dtype):
    """Block-banded weights for a strided 1x1 conv in packed-row layout."""
    cin, cout = ws_io.shape
    mask = (jnp.arange(win)[:, None] ==
            stride * jnp.arange(wout)[None, :]).astype(jnp.float32)
    b = jnp.einsum("po,ic->pioc", mask, ws_io.astype(jnp.float32))
    return b.reshape(win * cin, wout * cout).astype(dtype)


def _fold_bn(gamma, beta, mean, var, rep):
    """Fold BN (inference) into per-packed-position scale/shift rows (2, rep*C)."""
    scale = gamma.astype(jnp.float32) * lax.rsqrt(var.astype(jnp.float32) + EPS)
    shift = beta.astype(jnp.float32) - mean.astype(jnp.float32) * scale
    return jnp.stack([jnp.tile(scale, rep), jnp.tile(shift, rep)])


# --------------------------------- kernel ------------------------------------
def _conv3x3_rows(lhs, w_ref, h_out, stride):
    """3x3 'same' conv in packed-row layout: 3 matmuls (one per vertical tap).

    lhs:   (h_in, win*cin) activation, compute dtype.
    w_ref: (3, win*cin, wout*cout) banded weights (horizontal taps + padding
           + horizontal stride folded in).
    Vertical zero padding: two concatenated zero rows. Vertical stride: rows
    subsampled BEFORE the matmul so only h_out rows of output are computed.
    Returns (h_out, wout*cout) float32.
    """
    zrow = jnp.zeros((1, lhs.shape[1]), lhs.dtype)
    lhs_pad = jnp.concatenate([zrow, lhs, zrow], axis=0)     # (h_in + 2, win*cin)
    acc = None
    for dy in range(3):
        if stride == 1:
            slab = lhs_pad[dy:dy + h_out]
        else:
            slab = lhs_pad[dy:dy + stride * (h_out - 1) + 1:stride]
        part = jnp.dot(slab, w_ref[dy], preferred_element_type=jnp.float32)
        acc = part if acc is None else acc + part
    return acc


def _basic_block_kernel(x_ref, w1_ref, w2_ref, ws_ref, bn1_ref, bn2_ref, o_ref,
                        *, Ho, stride, use_preact_shortcut, need_shortcut_conv,
                        compute_dtype):
    x = x_ref[0].astype(jnp.float32)                   # (H, W*Cin), lane-dense

    # --- pre_act: folded BN1 (inference) + ReLU, f32 --------------------------
    a = jnp.maximum(x * bn1_ref[0:1, :] + bn1_ref[1:2, :], 0.0)
    a_c = a.astype(compute_dtype)

    # --- shortcut path --------------------------------------------------------
    if need_shortcut_conv:
        sc_lhs = a_c if use_preact_shortcut else x.astype(compute_dtype)
        if stride != 1:
            sc_lhs = sc_lhs[::stride][:Ho]             # subsample rows first
        sc = jnp.dot(sc_lhs, ws_ref[...], preferred_element_type=jnp.float32)
    else:
        sc = a if use_preact_shortcut else x           # identity (shapes match)

    # --- direct path ----------------------------------------------------------
    h = _conv3x3_rows(a_c, w1_ref, Ho, stride)                  # conv1 (stride)
    # dropout1: identity (eval mode)
    h = jnp.maximum(h * bn2_ref[0:1, :] + bn2_ref[1:2, :], 0.0)  # BN2 + ReLU
    h = _conv3x3_rows(h.astype(compute_dtype), w2_ref, Ho, 1)    # conv2

    # --- residual add (store is full-lane-width: Wo*Chid lanes) ---------------
    o_ref[0] = (h + sc).astype(o_ref.dtype)


# -------------------------------- wrapper ------------------------------------
def basic_block_forward(x_nchw, params, *, preact_option, stride=1,
                        compute_dtype=jnp.bfloat16):
    """Fused BasicBlock forward. Input/output are PyTorch-style NCHW (f32 out)."""
    N, Cin, H, W = x_nchw.shape
    Chid = params["conv1"].shape[0]
    need_preact = Cin != Chid
    need_shortcut_conv = (stride != 1) or (Cin != Chid)
    Ho = (H - 1) // stride + 1
    Wo = (W - 1) // stride + 1

    # Glue: NCHW -> packed rows (N, H, W*Cin); banded weights; folded BN.
    # (When stacking blocks, keep the packed layout between blocks instead of
    #  transposing at every boundary.)
    x_pk = jnp.transpose(x_nchw, (0, 2, 3, 1)).reshape(N, H, W * Cin)
    x_pk = x_pk.astype(compute_dtype)

    w1_hwio = jnp.transpose(params["conv1"], (2, 3, 1, 0))       # (3,3,Cin,Chid)
    w2_hwio = jnp.transpose(params["conv2"], (2, 3, 1, 0))       # (3,3,Chid,Chid)
    w1b = _banded_conv3x3(w1_hwio, W, Wo, stride, compute_dtype)
    w2b = _banded_conv3x3(w2_hwio, Wo, Wo, 1, compute_dtype)
    if need_shortcut_conv:
        ws_io = jnp.transpose(params["conv3"][:, :, 0, 0], (1, 0))   # (Cin,Chid)
        wsb = _banded_conv1x1(ws_io, W, Wo, stride, compute_dtype)
    else:
        wsb = jnp.zeros((W * Cin, Wo * Chid), compute_dtype)         # unused

    bn1 = _fold_bn(params["bn1_gamma"], params["bn1_beta"],
                   params["bn1_mean"], params["bn1_var"], W)         # (2, W*Cin)
    bn2 = _fold_bn(params["bn2_gamma"], params["bn2_beta"],
                   params["bn2_mean"], params["bn2_var"], Wo)        # (2, Wo*Chid)

    kernel = functools.partial(
        _basic_block_kernel,
        Ho=Ho, stride=stride,
        use_preact_shortcut=bool(preact_option) and need_preact,
        need_shortcut_conv=need_shortcut_conv,
        compute_dtype=compute_dtype)

    grid_spec = pltpu.PrefetchScalarGridSpec(
        num_scalar_prefetch=0,
        grid=(N,),
        in_specs=[
            pl.BlockSpec((1, H, W * Cin), lambda n: (n, 0, 0)),
            pl.BlockSpec((3, W * Cin, Wo * Chid), lambda n: (0, 0, 0)),
            pl.BlockSpec((3, Wo * Chid, Wo * Chid), lambda n: (0, 0, 0)),
            pl.BlockSpec((W * Cin, Wo * Chid), lambda n: (0, 0)),
            pl.BlockSpec((2, W * Cin), lambda n: (0, 0)),
            pl.BlockSpec((2, Wo * Chid), lambda n: (0, 0)),
        ],
        out_specs=pl.BlockSpec((1, Ho, Wo * Chid), lambda n: (n, 0, 0)),
    )

    out_pk = pl.pallas_call(
        kernel,
        out_shape=jax.ShapeDtypeStruct((N, Ho, Wo * Chid), jnp.float32),
        grid_spec=grid_spec,
        compiler_params=pltpu.CompilerParams(
            dimension_semantics=("parallel",)),       # batch across TCs on v7x
    )(x_pk, w1b, w2b, wsb, bn1, bn2)

    out = out_pk.reshape(N, Ho, Wo, Chid)
    return jnp.transpose(out, (0, 3, 1, 2))           # back to NCHW


# ------------------------- pure-JAX reference (NCHW) -------------------------
def basic_block_reference(x, params, *, preact_option, stride=1):
    Cin = x.shape[1]
    Chid = params["conv1"].shape[0]
    need_preact = Cin != Chid

    def bn(v, g, b, m, var):
        sh = (1, -1, 1, 1)
        return (v - m.reshape(sh)) / jnp.sqrt(var.reshape(sh) + EPS) \
            * g.reshape(sh) + b.reshape(sh)

    def conv(inp, w, s, p):
        return lax.conv_general_dilated(
            inp, w, (s, s), [(p, p), (p, p)],
            dimension_numbers=("NCHW", "OIHW", "NCHW"),
            precision=lax.Precision.HIGHEST)

    a = jax.nn.relu(bn(x, params["bn1_gamma"], params["bn1_beta"],
                       params["bn1_mean"], params["bn1_var"]))
    sc_in = a if (preact_option and need_preact) else x
    if stride != 1 or Cin != Chid:
        sc = conv(sc_in, params["conv3"], stride, 0)
    else:
        sc = sc_in
    h = conv(a, params["conv1"], stride, 1)
    h = jax.nn.relu(bn(h, params["bn2_gamma"], params["bn2_beta"],
                       params["bn2_mean"], params["bn2_var"]))
    h = conv(h, params["conv2"], 1, 1)
    return h + sc


if __name__ == "__main__":
    # Shapes consistent with BasicBlock(channel_in=4, channel_hidden=8,
    # drop_rate=0.3, preact_option=True, stride=1), input NCHW (2, 4, 16, 16).
    N, Cin, Chid, H, W = 2, 4, 8, 16, 16
    preact_option = True
    stride = 1

    key = jax.random.PRNGKey(0)
    kx, k1, k2, k3, kb = jax.random.split(key, 5)
    x = jax.random.normal(kx, (N, Cin, H, W), jnp.float32)

    kb1, kb2, kb3, kb4, kb5, kb6, kb7, kb8 = jax.random.split(kb, 8)
    params = {
        "conv1": 0.1 * jax.random.normal(k1, (Chid, Cin, 3, 3), jnp.float32),
        "conv2": 0.1 * jax.random.normal(k2, (Chid, Chid, 3, 3), jnp.float32),
        "conv3": 0.1 * jax.random.normal(k3, (Chid, Cin, 1, 1), jnp.float32),
        "bn1_gamma": 1.0 + 0.1 * jax.random.normal(kb1, (Cin,), jnp.float32),
        "bn1_beta": 0.1 * jax.random.normal(kb2, (Cin,), jnp.float32),
        "bn1_mean": 0.1 * jax.random.normal(kb3, (Cin,), jnp.float32),
        "bn1_var": jax.random.uniform(kb4, (Cin,), jnp.float32, 0.5, 1.5),
        "bn2_gamma": 1.0 + 0.1 * jax.random.normal(kb5, (Chid,), jnp.float32),
        "bn2_beta": 0.1 * jax.random.normal(kb6, (Chid,), jnp.float32),
        "bn2_mean": 0.1 * jax.random.normal(kb7, (Chid,), jnp.float32),
        "bn2_var": jax.random.uniform(kb8, (Chid,), jnp.float32, 0.5, 1.5),
    }

    ref = basic_block_reference(x, params, preact_option=preact_option,
                                stride=stride)

    # f32 compute path: tight check.
    out_f32 = basic_block_forward(x, params, preact_option=preact_option,
                                  stride=stride, compute_dtype=jnp.float32)
    out_f32 = jax.block_until_ready(out_f32)
    assert out_f32.shape == ref.shape, (out_f32.shape, ref.shape)
    assert jnp.allclose(out_f32, ref, atol=2e-3, rtol=2e-3), float(
        jnp.max(jnp.abs(out_f32 - ref)))

    # bf16 (MXU-native) compute path: bf16-appropriate tolerance.
    out_bf16 = basic_block_forward(x, params, preact_option=preact_option,
                                   stride=stride, compute_dtype=jnp.bfloat16)
    out_bf16 = jax.block_until_ready(out_bf16)
    assert out_bf16.shape == ref.shape, (out_bf16.shape, ref.shape)
    assert jnp.allclose(out_bf16, ref, atol=5e-2, rtol=5e-2), float(
        jnp.max(jnp.abs(out_bf16 - ref)))

    print("KERNEL_OK")
</pallas_src>

<mosaic_0001>
module attributes {stable_mosaic.version = 11 : i64} {
  func.func @_basic_block_kernel(%arg0: i32, %arg1: memref<1x16x64xf32, #tpu.memory_space<vmem>>, %arg2: memref<3x64x128xf32, #tpu.memory_space<vmem>>, %arg3: memref<3x128x128xf32, #tpu.memory_space<vmem>>, %arg4: memref<64x128xf32, #tpu.memory_space<vmem>>, %arg5: memref<2x64xf32, #tpu.memory_space<vmem>>, %arg6: memref<2x128xf32, #tpu.memory_space<vmem>>, %arg7: memref<1x16x128xf32, #tpu.memory_space<vmem>>) attributes {dimension_semantics = [#tpu.dimension_semantics<parallel>], iteration_bounds = array<i64: 2>, scalar_prefetch = 0 : i64, scratch_operands = 0 : i64, tpu.core_type = #tpu.core_type<tc>, window_params = [{transform_indices = @transform_0, window_bounds = array<i64: 1, 16, 64>}, {pipeline_mode = #tpu.pipeline_mode<synchronous>, transform_indices = @transform_1, window_bounds = array<i64: 3, 64, 128>}, {pipeline_mode = #tpu.pipeline_mode<synchronous>, transform_indices = @transform_2, window_bounds = array<i64: 3, 128, 128>}, {pipeline_mode = #tpu.pipeline_mode<synchronous>, transform_indices = @transform_3, window_bounds = array<i64: 64, 128>}, {pipeline_mode = #tpu.pipeline_mode<synchronous>, transform_indices = @transform_4, window_bounds = array<i64: 2, 64>}, {pipeline_mode = #tpu.pipeline_mode<synchronous>, transform_indices = @transform_5, window_bounds = array<i64: 2, 128>}, {transform_indices = @transform_6, window_bounds = array<i64: 1, 16, 128>}]} {
    %c0 = arith.constant 0 : index
    %c0_0 = arith.constant 0 : index
    %c0_1 = arith.constant 0 : index
    %0 = vector.load %arg1[%c0, %c0_0, %c0_1] : memref<1x16x64xf32, #tpu.memory_space<vmem>>, vector<1x16x64xf32>
    %1 = vector.shape_cast %0 : vector<1x16x64xf32> to vector<16x64xf32>
    %c0_2 = arith.constant 0 : index
    %c0_3 = arith.constant 0 : index
    %2 = vector.load %arg5[%c0_2, %c0_3] : memref<2x64xf32, #tpu.memory_space<vmem>>, vector<1x64xf32>
    %3 = vector.broadcast %2 : vector<1x64xf32> to vector<16x64xf32>
    %4 = arith.mulf %1, %3 : vector<16x64xf32>
    %c1 = arith.constant 1 : index
    %c0_4 = arith.constant 0 : index
    %5 = vector.load %arg5[%c1, %c0_4] : memref<2x64xf32, #tpu.memory_space<vmem>>, vector<1x64xf32>
    %6 = vector.broadcast %5 : vector<1x64xf32> to vector<16x64xf32>
    %7 = arith.addf %4, %6 : vector<16x64xf32>
    %cst = arith.constant 0.000000e+00 : f32
    %8 = vector.broadcast %cst : f32 to vector<16x64xf32>
    %9 = arith.maximumf %7, %8 : vector<16x64xf32>
    %c0_5 = arith.constant 0 : index
    %c0_6 = arith.constant 0 : index
    %10 = vector.load %arg4[%c0_5, %c0_6] : memref<64x128xf32, #tpu.memory_space<vmem>>, vector<64x128xf32>
    %cst_7 = arith.constant dense<0.000000e+00> : vector<16x128xf32>
    %11 = tpu.matmul %9, %10, %cst_7 {dimension_numbers = #tpu.dot_dimension_numbers<[1], [0], [0], [1], [0, 0, 1, 1], [], []>} : vector<16x64xf32>, vector<64x128xf32>, vector<16x128xf32> -> vector<16x128xf32>
    %cst_8 = arith.constant 0.000000e+00 : f32
    %12 = vector.broadcast %cst_8 : f32 to vector<1x64xf32>
    %13 = tpu.concatenate %12, %9, %12 in 0 : vector<1x64xf32>, vector<16x64xf32>, vector<1x64xf32> -> vector<18x64xf32>
    %14 = vector.extract_strided_slice %13 {offsets = [0, 0], sizes = [16, 64], strides = [1, 1]} : vector<18x64xf32> to vector<16x64xf32>
    %c0_9 = arith.constant 0 : index
    %c0_10 = arith.constant 0 : index
    %c0_11 = arith.constant 0 : index
    %15 = vector.load %arg2[%c0_9, %c0_10, %c0_11] : memref<3x64x128xf32, #tpu.memory_space<vmem>>, vector<1x64x128xf32>
    %16 = vector.shape_cast %15 : vector<1x64x128xf32> to vector<64x128xf32>
    %cst_12 = arith.constant dense<0.000000e+00> : vector<16x128xf32>
    %17 = tpu.matmul %14, %16, %cst_12 {dimension_numbers = #tpu.dot_dimension_numbers<[1], [0], [0], [1], [0, 0, 1, 1], [], []>} : vector<16x64xf32>, vector<64x128xf32>, vector<16x128xf32> -> vector<16x128xf32>
    %18 = vector.extract_strided_slice %13 {offsets = [1, 0], sizes = [16, 64], strides = [1, 1]} : vector<18x64xf32> to vector<16x64xf32>
    %c1_13 = arith.constant 1 : index
    %c0_14 = arith.constant 0 : index
    %c0_15 = arith.constant 0 : index
    %19 = vector.load %arg2[%c1_13, %c0_14, %c0_15] : memref<3x64x128xf32, #tpu.memory_space<vmem>>, vector<1x64x128xf32>
    %20 = vector.shape_cast %19 : vector<1x64x128xf32> to vector<64x128xf32>
    %cst_16 = arith.constant dense<0.000000e+00> : vector<16x128xf32>
    %21 = tpu.matmul %18, %20, %cst_16 {dimension_numbers = #tpu.dot_dimension_numbers<[1], [0], [0], [1], [0, 0, 1, 1], [], []>} : vector<16x64xf32>, vector<64x128xf32>, vector<16x128xf32> -> vector<16x128xf32>
    %22 = arith.addf %17, %21 : vector<16x128xf32>
    %23 = vector.extract_strided_slice %13 {offsets = [2, 0], sizes = [16, 64], strides = [1, 1]} : vector<18x64xf32> to vector<16x64xf32>
    %c2 = arith.constant 2 : index
    %c0_17 = arith.constant 0 : index
    %c0_18 = arith.constant 0 : index
    %24 = vector.load %arg2[%c2, %c0_17, %c0_18] : memref<3x64x128xf32, #tpu.memory_space<vmem>>, vector<1x64x128xf32>
    %25 = vector.shape_cast %24 : vector<1x64x128xf32> to vector<64x128xf32>
    %cst_19 = arith.constant dense<0.000000e+00> : vector<16x128xf32>
    %26 = tpu.matmul %23, %25, %cst_19 {dimension_numbers = #tpu.dot_dimension_numbers<[1], [0], [0], [1], [0, 0, 1, 1], [], []>} : vector<16x64xf32>, vector<64x128xf32>, vector<16x128xf32> -> vector<16x128xf32>
    %27 = arith.addf %22, %26 : vector<16x128xf32>
    %c0_20 = arith.constant 0 : index
    %c0_21 = arith.constant 0 : index
    %28 = vector.load %arg6[%c0_20, %c0_21] : memref<2x128xf32, #tpu.memory_space<vmem>>, vector<1x128xf32>
    %29 = vector.broadcast %28 : vector<1x128xf32> to vector<16x128xf32>
    %30 = arith.mulf %27, %29 : vector<16x128xf32>
    %c1_22 = arith.constant 1 : index
    %c0_23 = arith.constant 0 : index
    %31 = vector.load %arg6[%c1_22, %c0_23] : memref<2x128xf32, #tpu.memory_space<vmem>>, vector<1x128xf32>
    %32 = vector.broadcast %31 : vector<1x128xf32> to vector<16x128xf32>
    %33 = arith.addf %30, %32 : vector<16x128xf32>
    %cst_24 = arith.constant 0.000000e+00 : f32
    %34 = vector.broadcast %cst_24 : f32 to vector<16x128xf32>
    %35 = arith.maximumf %33, %34 : vector<16x128xf32>
    %cst_25 = arith.constant 0.000000e+00 : f32
    %36 = vector.broadcast %cst_25 : f32 to vector<1x128xf32>
    %37 = tpu.concatenate %36, %35, %36 in 0 : vector<1x128xf32>, vector<16x128xf32>, vector<1x128xf32> -> vector<18x128xf32>
    %38 = vector.extract_strided_slice %37 {offsets = [0, 0], sizes = [16, 128], strides = [1, 1]} : vector<18x128xf32> to vector<16x128xf32>
    %c0_26 = arith.constant 0 : index
    %c0_27 = arith.constant 0 : index
    %c0_28 = arith.constant 0 : index
    %39 = vector.load %arg3[%c0_26, %c0_27, %c0_28] : memref<3x128x128xf32, #tpu.memory_space<vmem>>, vector<1x128x128xf32>
    %40 = vector.shape_cast %39 : vector<1x128x128xf32> to vector<128x128xf32>
    %cst_29 = arith.constant dense<0.000000e+00> : vector<16x128xf32>
    %41 = tpu.matmul %38, %40, %cst_29 {dimension_numbers = #tpu.dot_dimension_numbers<[1], [0], [0], [1], [0, 0, 1, 1], [], []>} : vector<16x128xf32>, vector<128x128xf32>, vector<16x128xf32> -> vector<16x128xf32>
    %42 = vector.extract_strided_slice %37 {offsets = [1, 0], sizes = [16, 128], strides = [1, 1]} : vector<18x128xf32> to vector<16x128xf32>
    %c1_30 = arith.constant 1 : index
    %c0_31 = arith.constant 0 : index
    %c0_32 = arith.constant 0 : index
    %43 = vector.load %arg3[%c1_30, %c0_31, %c0_32] : memref<3x128x128xf32, #tpu.memory_space<vmem>>, vector<1x128x128xf32>
    %44 = vector.shape_cast %43 : vector<1x128x128xf32> to vector<128x128xf32>
    %cst_33 = arith.constant dense<0.000000e+00> : vector<16x128xf32>
    %45 = tpu.matmul %42, %44, %cst_33 {dimension_numbers = #tpu.dot_dimension_numbers<[1], [0], [0], [1], [0, 0, 1, 1], [], []>} : vector<16x128xf32>, vector<128x128xf32>, vector<16x128xf32> -> vector<16x128xf32>
    %46 = arith.addf %41, %45 : vector<16x128xf32>
    %47 = vector.extract_strided_slice %37 {offsets = [2, 0], sizes = [16, 128], strides = [1, 1]} : vector<18x128xf32> to vector<16x128xf32>
    %c2_34 = arith.constant 2 : index
    %c0_35 = arith.constant 0 : index
    %c0_36 = arith.constant 0 : index
    %48 = vector.load %arg3[%c2_34, %c0_35, %c0_36] : memref<3x128x128xf32, #tpu.memory_space<vmem>>, vector<1x128x128xf32>
    %49 = vector.shape_cast %48 : vector<1x128x128xf32> to vector<128x128xf32>
    %cst_37 = arith.constant dense<0.000000e+00> : vector<16x128xf32>
    %50 = tpu.matmul %47, %49, %cst_37 {dimension_numbers = #tpu.dot_dimension_numbers<[1], [0], [0], [1], [0, 0, 1, 1], [], []>} : vector<16x128xf32>, vector<128x128xf32>, vector<16x128xf32> -> vector<16x128xf32>
    %51 = arith.addf %46, %50 : vector<16x128xf32>
    %52 = arith.addf %51, %11 : vector<16x128xf32>
    %c0_38 = arith.constant 0 : index
    %c0_39 = arith.constant 0 : index
    %c0_40 = arith.constant 0 : index
    %53 = vector.load %arg7[%c0_38, %c0_39, %c0_40] : memref<1x16x128xf32, #tpu.memory_space<vmem>>, vector<1x16x128xf32>
    %54 = vector.shape_cast %53 : vector<1x16x128xf32> to vector<16x128xf32>
    %55 = vector.shape_cast %52 : vector<16x128xf32> to vector<1x16x128xf32>
    tpu.vector_store %arg7[%c0_38, %c0_39, %c0_40], %55 {strides = array<i32>} : memref<1x16x128xf32, #tpu.memory_space<vmem>>, vector<1x16x128xf32>,
    return
  }
  func.func @transform_0(%arg0: i32) -> (i32, i32, i32) {
    %c0_i32 = arith.constant 0 : i32
    %c0_i32_0 = arith.constant 0 : i32
    %c0_i32_1 = arith.constant 0 : i32
    return %arg0, %c0_i32, %c0_i32_0 : i32, i32, i32
  }
  func.func @transform_1(%arg0: i32) -> (i32, i32, i32) {
    %c0_i32 = arith.constant 0 : i32
    %c0_i32_0 = arith.constant 0 : i32
    %c0_i32_1 = arith.constant 0 : i32
    %c0_i32_2 = arith.constant 0 : i32
    return %c0_i32, %c0_i32_0, %c0_i32_1 : i32, i32, i32
  }
  func.func @transform_2(%arg0: i32) -> (i32, i32, i32) {
    %c0_i32 = arith.constant 0 : i32
    %c0_i32_0 = arith.constant 0 : i32
    %c0_i32_1 = arith.constant 0 : i32
    %c0_i32_2 = arith.constant 0 : i32
    return %c0_i32, %c0_i32_0, %c0_i32_1 : i32, i32, i32
  }
  func.func @transform_3(%arg0: i32) -> (i32, i32) {
    %c0_i32 = arith.constant 0 : i32
    %c0_i32_0 = arith.constant 0 : i32
    %c0_i32_1 = arith.constant 0 : i32
    return %c0_i32, %c0_i32_0 : i32, i32
  }
  func.func @transform_4(%arg0: i32) -> (i32, i32) {
    %c0_i32 = arith.constant 0 : i32
    %c0_i32_0 = arith.constant 0 : i32
    %c0_i32_1 = arith.constant 0 : i32
    return %c0_i32, %c0_i32_0 : i32, i32
  }
  func.func @transform_5(%arg0: i32) -> (i32, i32) {
    %c0_i32 = arith.constant 0 : i32
    %c0_i32_0 = arith.constant 0 : i32
    %c0_i32_1 = arith.constant 0 : i32
    return %c0_i32, %c0_i32_0 : i32, i32
  }
  func.func @transform_6(%arg0: i32) -> (i32, i32, i32) {
    %c0_i32 = arith.constant 0 : i32
    %c0_i32_0 = arith.constant 0 : i32
    %c0_i32_1 = arith.constant 0 : i32
    return %arg0, %c0_i32, %c0_i32_0 : i32, i32, i32
  }
}

</mosaic_0001>

<llo_original>
// kernel: tpu_custom_call.1
$region0: #{tpu_custom_call.1}
  #allocation0 [shape = 'u32[]', space=smem, size = 0x4, offset = 0x4, fixed_abs, tag = 'smem constant byte address 0x4 - core index']
  #allocation1 [shape = 'u32[72,128]{1,0:T(1,128)}', space=vmem, size = 0x9000, scoped, tag = 'internal scratch']
  %s0 = inlined_call_operand.hbm [shape: f32[2,16,64], index: 0, kind: input, shape index: {}]
  %s1 = inlined_call_operand.hbm [shape: f32[3,64,128], index: 1, kind: input, shape index: {}]
  %s2 = inlined_call_operand.hbm [shape: f32[3,128,128], index: 2, kind: input, shape index: {}]
  %s3 = inlined_call_operand.hbm [shape: f32[64,128], index: 3, kind: input, shape index: {}]
  %s4 = inlined_call_operand.vmem [shape: f32[2,64], index: 4, kind: input, shape index: {}]
  %s5 = inlined_call_operand.vmem [shape: f32[2,128], index: 5, kind: input, shape index: {}]
  %s6 = inlined_call_operand.hbm [shape: f32[2,16,128], index: 6, kind: output, shape index: {}]
  %s7 = sld [smem:[#allocation0]]
  $region73: #{tpu_custom_call.1} parent=0
    _
  %s9 = ssub.s32 1, %s7
  %s10 = scalar_select 0, %s9, %s7
  $region1: #{tpu_custom_call.1} parent=0
    #allocation2 [shape = 'u8[16384]{0}', space=vmem, size = 0x4000, scoped, tag = 'input window, operand 0']
    #allocation3 [shape = 's32[2]{0}', space=sflag, size = 0x8, scoped, tag = 'scoped memory for tpu_custom_call.1']
    #allocation4 [shape = 's32[2]{0}', space=sflag, size = 0x8, scoped, tag = 'scoped memory for tpu_custom_call.1']
    #allocation5 [shape = 'u8[98304]{0}', space=vmem, size = 0x18000, scoped, tag = 'input window, operand 1, single buffered']
    #allocation6 [shape = 's32[1]{0}', space=sflag, size = 0x4, scoped, tag = 'scoped memory for tpu_custom_call.1']
    #allocation7 [shape = 'u8[196608]{0}', space=vmem, size = 0x30000, scoped, tag = 'input window, operand 2, single buffered']
    #allocation8 [shape = 'u8[32768]{0}', space=vmem, size = 0x8000, scoped, tag = 'input window, operand 3, single buffered']
    #allocation9 [shape = 's32[1]{0}', space=sflag, size = 0x4, scoped, tag = 'scoped memory for tpu_custom_call.1']
    #allocation10 [shape = 'u8[16384]{0}', space=vmem, size = 0x4000, scoped, tag = 'output window, operand 0']
    %11 = vsyncpa [#allocation3], 0
    %s12 = scalar_lea.sflag [#allocation3], 1
    %13 = vsyncpa %s12, 0
    %14 = vsyncpa [#allocation6], 0
    %15 = vsyncpa [#allocation9], 0
    %16 = vsyncpa [#allocation4], 0
    %s17 = scalar_lea.sflag [#allocation4], 1
    %18 = vsyncpa %s17, 0
    loop: start=0, step=1, limit=4
    $region2: #{tpu_custom_call.1} parent=1 // loop_pre_header
      _
    $region3: #{tpu_custom_call.1} parent=1 // loop_header
      %s20 = sphi 0, %s24
      %p21 = scmp.ge.s32.totalorder %s20, 4
      %s30 = sphi 0, %s32
      %s33 = sphi 0, %s30
      %s34 = sphi 0, %s33
      %s50 = sphi 0, %s34
      %s54 = sphi 0, %s54
      %s56 = sphi 0, %s54
      %s57 = sphi 0, %s56
      %s71 = sphi 0, %s57
      %s75 = sphi 0, %s75
      %s77 = sphi 0, %s75
      %s78 = sphi 0, %s77
      %s92 = sphi 0, %s78
      %s96 = sphi 0, %s96
      %s98 = sphi 0, %s96
      %s99 = sphi 0, %s98
      %s113 = sphi 0, %s99
      %s117 = sphi 0, %s117
      %s119 = sphi 0, %s117
      %s120 = sphi 0, %s119
      %s134 = sphi 0, %s120
      %s138 = sphi 0, %s138
      %s140 = sphi 0, %s138
      %s141 = sphi 0, %s140
      %s155 = sphi 0, %s141
      %s161 = sphi 0, %s163
      %s164 = sphi 0, %s161
      %s165 = sphi 0, %s164
      %s181 = sphi 0, %s165
    $region4: #{tpu_custom_call.1} parent=1 // loop_header_branch
      %23 = sbr.rel (%p21) target = $region8
    $region5: #{tpu_custom_call.1} parent=1 // loop_body
      %s25 = ssub.s32 %s20, 1
      %s26 = ssub.s32 %s20, 2
      %s27 = sadd.s32 %s20, 1
      %s28 = ssub.s32 %s20, %s27
      %p29 = scmp.eq.s32.totalorder %s28, 0
      %s31 = sadd.s32 %s30, 1
      %s32 = scalar_select %p29, %s30, %s31
      %p35 = pneg %p29
      %p36 = scmp.eq.s32.totalorder %s20, 1
      %p37 = por %p35, %p36
      %p38 = scmp.ne.s32.totalorder %s30, %s33
      %p39 = scmp.eq.s32.totalorder %s20, 0
      %p40 = por %p38, %p39
      %p41 = scmp.ne.s32.totalorder %s30, %s33
      %p42 = scmp.eq.s32.totalorder %s25, 1
      %p43 = por %p41, %p42
      %p44 = scmp.ne.s32.totalorder %s33, %s34
      %p45 = scmp.eq.s32.totalorder %s25, 0
      %p46 = por %p44, %p45
      %p47 = scmp.ne.s32.totalorder %s33, %s34
      %p48 = scmp.eq.s32.totalorder %s26, 1
      %p49 = por %p47, %p48
      %p51 = scmp.ne.s32.totalorder %s34, %s50
      %p52 = scmp.eq.s32.totalorder %s26, 0
      %p53 = por %p51, %p52
      %s55 = sadd.s32 %s54, 1
      %p58 = scmp.eq.s32.totalorder %s20, 1
      %p59 = scmp.ne.s32.totalorder %s54, %s56
      %p60 = scmp.eq.s32.totalorder %s20, 0
      %p61 = por %p59, %p60
      %p62 = scmp.ne.s32.totalorder %s54, %s56
      %p63 = scmp.eq.s32.totalorder %s25, 1
      %p64 = por %p62, %p63
      %p65 = scmp.ne.s32.totalorder %s56, %s57
      %p66 = scmp.eq.s32.totalorder %s25, 0
      %p67 = por %p65, %p66
      %p68 = scmp.ne.s32.totalorder %s56, %s57
      %p69 = scmp.eq.s32.totalorder %s26, 1
      %p70 = por %p68, %p69
      %p72 = scmp.ne.s32.totalorder %s57, %s71
      %p73 = scmp.eq.s32.totalorder %s26, 0
      %p74 = por %p72, %p73
      %s76 = sadd.s32 %s75, 1
      %p79 = scmp.eq.s32.totalorder %s20, 1
      %p80 = scmp.ne.s32.totalorder %s75, %s77
      %p81 = scmp.eq.s32.totalorder %s20, 0
      %p82 = por %p80, %p81
      %p83 = scmp.ne.s32.totalorder %s75, %s77
      %p84 = scmp.eq.s32.totalorder %s25, 1
      %p85 = por %p83, %p84
      %p86 = scmp.ne.s32.totalorder %s77, %s78
      %p87 = scmp.eq.s32.totalorder %s25, 0
      %p88 = por %p86, %p87
      %p89 = scmp.ne.s32.totalorder %s77, %s78
      %p90 = scmp.eq.s32.totalorder %s26, 1
      %p91 = por %p89, %p90
      %p93 = scmp.ne.s32.totalorder %s78, %s92
      %p94 = scmp.eq.s32.totalorder %s26, 0
      %p95 = por %p93, %p94
      %s97 = sadd.s32 %s96, 1
      %p100 = scmp.eq.s32.totalorder %s20, 1
      %p101 = scmp.ne.s32.totalorder %s96, %s98
      %p102 = scmp.eq.s32.totalorder %s20, 0
      %p103 = por %p101, %p102
      %p104 = scmp.ne.s32.totalorder %s96, %s98
      %p105 = scmp.eq.s32.totalorder %s25, 1
      %p106 = por %p104, %p105
      %p107 = scmp.ne.s32.totalorder %s98, %s99
      %p108 = scmp.eq.s32.totalorder %s25, 0
      %p109 = por %p107, %p108
      %p110 = scmp.ne.s32.totalorder %s98, %s99
      %p111 = scmp.eq.s32.totalorder %s26, 1
      %p112 = por %p110, %p111
      %p114 = scmp.ne.s32.totalorder %s99, %s113
      %p115 = scmp.eq.s32.totalorder %s26, 0
      %p116 = por %p114, %p115
      %s118 = sadd.s32 %s117, 1
      %p121 = scmp.eq.s32.totalorder %s20, 1
      %p122 = scmp.ne.s32.totalorder %s117, %s119
      %p123 = scmp.eq.s32.totalorder %s20, 0
      %p124 = por %p122, %p123
      %p125 = scmp.ne.s32.totalorder %s117, %s119
      %p126 = scmp.eq.s32.totalorder %s25, 1
      %p127 = por %p125, %p126
      %p128 = scmp.ne.s32.totalorder %s119, %s120
      %p129 = scmp.eq.s32.totalorder %s25, 0
      %p130 = por %p128, %p129
      %p131 = scmp.ne.s32.totalorder %s119, %s120
      %p132 = scmp.eq.s32.totalorder %s26, 1
      %p133 = por %p131, %p132
      %p135 = scmp.ne.s32.totalorder %s120, %s134
      %p136 = scmp.eq.s32.totalorder %s26, 0
      %p137 = por %p135, %p136
      %s139 = sadd.s32 %s138, 1
      %p142 = scmp.eq.s32.totalorder %s20, 1
      %p143 = scmp.ne.s32.totalorder %s138, %s140
      %p144 = scmp.eq.s32.totalorder %s20, 0
      %p145 = por %p143, %p144
      %p146 = scmp.ne.s32.totalorder %s138, %s140
      %p147 = scmp.eq.s32.totalorder %s25, 1
      %p148 = por %p146, %p147
      %p149 = scmp.ne.s32.totalorder %s140, %s141
      %p150 = scmp.eq.s32.totalorder %s25, 0
      %p151 = por %p149, %p150
      %p152 = scmp.ne.s32.totalorder %s140, %s141
      %p153 = scmp.eq.s32.totalorder %s26, 1
      %p154 = por %p152, %p153
      %p156 = scmp.ne.s32.totalorder %s141, %s155
      %p157 = scmp.eq.s32.totalorder %s26, 0
      %p158 = por %p156, %p157
      %s159 = ssub.s32 %s20, %s27
      %p160 = scmp.eq.s32.totalorder %s159, 0
      %s162 = sadd.s32 %s161, 1
      %s163 = scalar_select %p160, %s161, %s162
      %p166 = pneg %p160
      %p167 = scmp.eq.s32.totalorder %s20, 1
      %p168 = por %p166, %p167
      %p169 = scmp.ne.s32.totalorder %s161, %s164
      %p170 = scmp.eq.s32.totalorder %s20, 0
      %p171 = por %p169, %p170
      %p172 = scmp.ne.s32.totalorder %s161, %s164
      %p173 = scmp.eq.s32.totalorder %s25, 1
      %p174 = por %p172, %p173
      %p175 = scmp.ne.s32.totalorder %s164, %s165
      %p176 = scmp.eq.s32.totalorder %s25, 0
      %p177 = por %p175, %p176
      %p178 = scmp.ne.s32.totalorder %s164, %s165
      %p179 = scmp.eq.s32.totalorder %s26, 1
      %p180 = por %p178, %p179
      %p182 = scmp.ne.s32.totalorder %s165, %s181
      %p183 = scmp.eq.s32.totalorder %s26, 0
      %p184 = por %p182, %p183
      %p185 = scmp.le.s32.totalorder 1, %s20
      %p186 = scmp.lt.s32.totalorder %s20, 3
      %p187 = pnand %p185, %p186
      %p188 = pneg %p187
      // Predicated region
      $region9: #{tpu_custom_call.1} parent=5 // pred_check
        _
      $region10: #{tpu_custom_call.1} parent=5 // pred_check_branch
        %190 = sbr.rel (%p187) target = $region12
      $region11: #{tpu_custom_call.1} parent=5 // pred_region
        %s191 = ssub.s32 %s20, 1
        // Predicated region
        $region13: #{tpu_custom_call.1} parent=11 // pred_check
          %p192 = pneg %p67
        $region14: #{tpu_custom_call.1} parent=11 // pred_check_branch
          %194 = sbr.rel (%p192) target = $region16
        $region15: #{tpu_custom_call.1} parent=11 // pred_region
          %196 = vsyncadd [#allocation6], 0
          %s197 = sshll.u32 %s1, 4
          %s198 = int_to_ptr.hbm [resolvable:$true] %s197
          %s199 = sshll.u32 [#allocation5], 4
          %s200 = int_to_ptr.vmem [resolvable:$true] %s199
          %205 = dma.hbm_to_vmem [thread:$0]  %s198, 3072, %s200, [#allocation6], 128, 128, 8
        $region16: #{tpu_custom_call.1} parent=11 // pred_fallthru
          _
        // Predicated region
        $region17: #{tpu_custom_call.1} parent=11 // pred_check
          %p206 = pneg %p88
        $region18: #{tpu_custom_call.1} parent=11 // pred_check_branch
          %208 = sbr.rel (%p206) target = $region20
        $region19: #{tpu_custom_call.1} parent=11 // pred_region
          %210 = vsyncadd [#allocation6], 0
          %s211 = sshll.u32 %s2, 4
          %s212 = int_to_ptr.hbm [resolvable:$true] %s211
          %s213 = sshll.u32 [#allocation7], 4
          %s214 = int_to_ptr.vmem [resolvable:$true] %s213
          %219 = dma.hbm_to_vmem [thread:$0]  %s212, 6144, %s214, [#allocation6], 128, 128, 8
        $region20: #{tpu_custom_call.1} parent=11 // pred_fallthru
          _
        // Predicated region
        $region21: #{tpu_custom_call.1} parent=11 // pred_check
          %p220 = pneg %p109
        $region22: #{tpu_custom_call.1} parent=11 // pred_check_branch
          %222 = sbr.rel (%p220) target = $region24
        $region23: #{tpu_custom_call.1} parent=11 // pred_region
          %224 = vsyncadd [#allocation9], 0
          %s225 = sshll.u32 %s3, 4
          %s226 = int_to_ptr.hbm [resolvable:$true] %s225
          %s227 = sshll.u32 [#allocation8], 4
          %s228 = int_to_ptr.vmem [resolvable:$true] %s227
          %233 = dma.hbm_to_vmem [thread:$0]  %s226, 1024, %s228, [#allocation9], 128, 128, 8
        $region24: #{tpu_custom_call.1} parent=11 // pred_fallthru
          _
        // Predicated region
        $region25: #{tpu_custom_call.1} parent=11 // pred_check
          %p234 = pneg %p130
        $region26: #{tpu_custom_call.1} parent=11 // pred_check_branch
          %236 = sbr.rel (%p234) target = $region28
        $region27: #{tpu_custom_call.1} parent=11 // pred_region
          _
        $region28: #{tpu_custom_call.1} parent=11 // pred_fallthru
          _
        // Predicated region
        $region29: #{tpu_custom_call.1} parent=11 // pred_check
          %p237 = pneg %p151
        $region30: #{tpu_custom_call.1} parent=11 // pred_check_branch
          %239 = sbr.rel (%p237) target = $region32
        $region31: #{tpu_custom_call.1} parent=11 // pred_region
          _
        $region32: #{tpu_custom_call.1} parent=11 // pred_fallthru
          _
      $region12: #{tpu_custom_call.1} parent=5 // pred_fallthru
        _
      %p240 = scmp.lt.s32.totalorder %s20, 2
      // Predicated region
      $region33: #{tpu_custom_call.1} parent=5 // pred_check
        %p241 = pneg %p240
      $region34: #{tpu_custom_call.1} parent=5 // pred_check_branch
        %243 = sbr.rel (%p241) target = $region36
      $region35: #{tpu_custom_call.1} parent=5 // pred_region
        // Predicated region
        $region37: #{tpu_custom_call.1} parent=35 // pred_check
          %p244 = pneg %p40
        $region38: #{tpu_custom_call.1} parent=35 // pred_check_branch
          %246 = sbr.rel (%p244) target = $region40
        $region39: #{tpu_custom_call.1} parent=35 // pred_region
          %s247 = sand.u32 %s30, 1
          %s248 = scalar_lea.sflag [#allocation3], %s247
          %s249 = sand.u32 %s30, 1
          %s250 = smul.addr %s249, 16
          %s251 = scalar_lea.vmem [#allocation2], %s250
          %253 = vsyncadd %s248, 0
          %s254 = smul.addr %s20, 2
          %s255 = smul.addr %s254, 8
          %s256 = scalar_lea.hbm %s0, %s255
          %s257 = sshll.u32 %s256, 4
          %s258 = int_to_ptr.hbm [resolvable:$true] %s257
          %s259 = sshll.u32 %s251, 4
          %s260 = int_to_ptr.vmem [resolvable:$true] %s259
          %265 = dma.hbm_to_vmem [thread:$0]  %s258, 256, %s260, %s248, 128, 128, 8
        $region40: #{tpu_custom_call.1} parent=35 // pred_fallthru
          _
      $region36: #{tpu_custom_call.1} parent=5 // pred_fallthru
        _
      %p266 = scmp.le.s32.totalorder 1, %s20
      %p267 = scmp.lt.s32.totalorder %s20, 3
      %p268 = pnand %p266, %p267
      %p269 = pneg %p268
      // Predicated region
      $region41: #{tpu_custom_call.1} parent=5 // pred_check
        _
      $region42: #{tpu_custom_call.1} parent=5 // pred_check_branch
        %271 = sbr.rel (%p268) target = $region44
      $region43: #{tpu_custom_call.1} parent=5 // pred_region
        %s272 = ssub.s32 %s20, 1
        %s273 = sand.u32 %s33, 1
        %s274 = scalar_lea.sflag [#allocation3], %s273
        %s275 = sand.u32 %s33, 1
        %s276 = smul.addr %s275, 16
        %s277 = scalar_lea.vmem [#allocation2], %s276
        // Predicated region
        $region45: #{tpu_custom_call.1} parent=43 // pred_check
          %p278 = pneg %p46
        $region46: #{tpu_custom_call.1} parent=43 // pred_check_branch
          %280 = sbr.rel (%p278) target = $region48
        $region47: #{tpu_custom_call.1} parent=43 // pred_region
          %282 = dma.done %s274, 256
        $region48: #{tpu_custom_call.1} parent=43 // pred_fallthru
          _
        // Predicated region
        $region49: #{tpu_custom_call.1} parent=43 // pred_check
          %p283 = pneg %p67
        $region50: #{tpu_custom_call.1} parent=43 // pred_check_branch
          %285 = sbr.rel (%p283) target = $region52
        $region51: #{tpu_custom_call.1} parent=43 // pred_region
          %287 = dma.done [#allocation6], 3072
        $region52: #{tpu_custom_call.1} parent=43 // pred_fallthru
          _
        // Predicated region
        $region53: #{tpu_custom_call.1} parent=43 // pred_check
          %p288 = pneg %p88
        $region54: #{tpu_custom_call.1} parent=43 // pred_check_branch
          %290 = sbr.rel (%p288) target = $region56
        $region55: #{tpu_custom_call.1} parent=43 // pred_region
          %292 = dma.done [#allocation6], 6144
        $region56: #{tpu_custom_call.1} parent=43 // pred_fallthru
          _
        // Predicated region
        $region57: #{tpu_custom_call.1} parent=43 // pred_check
          %p293 = pneg %p109
        $region58: #{tpu_custom_call.1} parent=43 // pred_check_branch
          %295 = sbr.rel (%p293) target = $region60
        $region59: #{tpu_custom_call.1} parent=43 // pred_region
          %297 = dma.done [#allocation9], 1024
        $region60: #{tpu_custom_call.1} parent=43 // pred_fallthru
          _
        %s298 = sand.u32 %s33, 1
        %s299 = scalar_lea.sflag [#allocation3], %s298
        %s300 = sand.u32 %s33, 1
        %s301 = smul.addr %s300, 16
        %s302 = scalar_lea.vmem [#allocation2], %s301
        %p303 = pneg %p46
        %p304 = pneg %p43
        %p305 = pneg %p67
        %p306 = pneg %p64
        %p307 = pneg %p88
        %p308 = pneg %p85
        %p309 = pneg %p109
        %p310 = pneg %p106
        %p311 = pneg %p130
        %p312 = pneg %p127
        %p313 = pneg %p151
        %p314 = pneg %p148
        %p315 = pneg %p177
        %p316 = pneg %p174
        %s317 = sand.u32 %s164, 1
        %s318 = scalar_lea.sflag [#allocation4], %s317
        %s319 = sand.u32 %s164, 1
        %s320 = smul.addr %s319, 16
        %s321 = scalar_lea.vmem [#allocation10], %s320
        %v322 = vld [vmem:[%s277] sm:$0xff]
        %v323 = vld [vmem:[%s277 + $0x8] sm:$0xff]
        %v324 = vld [vmem:[%s4] sm:$0x1]
        %v325 = vperm.slane %v324, 0
        %v326 = vmul.f32 %v322, %v325
        %v327 = vmul.f32 %v323, %v325
        %v328 = vld [vmem:[%s4 + $0x1] sm:$0x1]
        %v329 = vperm.slane %v328, 0
        %v330 = vadd.f32 %v326, %v329
        %v331 = vadd.f32 %v327, %v329
        %v332 = vmax.f32 %v330, 0.0
        %v333 = vmax.f32 %v331, 0.0
        %v334 = vld [vmem:[#allocation8] sm:$0xff]
        %v335 = vld [vmem:[#allocation8 + $0x8] sm:$0xff]
        %v336 = vld [vmem:[#allocation8 + $0x10] sm:$0xff]
        %v337 = vld [vmem:[#allocation8 + $0x18] sm:$0xff]
        %v338 = vld [vmem:[#allocation8 + $0x20] sm:$0xff]
        %v339 = vld [vmem:[#allocation8 + $0x28] sm:$0xff]
        %v340 = vld [vmem:[#allocation8 + $0x30] sm:$0xff]
        %v341 = vld [vmem:[#allocation8 + $0x38] sm:$0xff]
        %vm342 = vcmask 523264
        %v344 = vsel %vm342, %v332, 0
        %v347 = vsel %vm342, %v333, 0
        %349 = vmatpush.msra.mxu0 0.0
        %350 = vmatpush.msra.mxu0 0.0
        %351 = vmatpush.msra.mxu0 0.0
        %352 = vmatpush.msra.mxu0 0.0
        %353 = vmatpush.msra.mxu0 0.0
        %354 = vmatpush.msra.mxu0 0.0
        %355 = vmatpush.msra.mxu0 0.0
        %356 = vmatpush.msra.mxu0 0.0
        %357 = vmatpush.msra.mxu0 %v341
        %358 = vmatpush.msra.mxu0 %v340
        %359 = vmatpush.msra.mxu0 %v339
        %360 = vmatpush.msra.mxu0 %v338
        %361 = vmatpush.msra.mxu0 %v337
        %362 = vmatpush.msra.mxu0 %v336
        %363 = vmatpush.msra.mxu0 %v335
        %364 = vmatpush.msra.mxu0 %v334
        %365 = vmatmul.f32.gmra.mxu0 %v344
        %v366 = vpop.f32.mrf.mxu0
        %v367 = vadd.f32 0.0, %v366
        %368 = vmatmul.f32.gmra.mxu0 %v347
        %v369 = vpop.f32.mrf.mxu0
        %v370 = vadd.f32 0.0, %v369
        %371 = vdwg.mxu0
        %vm372 = vcmask 1040384
        %v373 = vrot.slane %v332, 7
        %v374 = vrot.slane %v333, 7
        %v375 = vsel %vm372, %v373, %v374
        %v378 = vsel %vm372, 0.0, %v373
        %v379 = vsel %vm372, %v374, 0.0
        %v380 = vld [vmem:[#allocation5] sm:$0xff]
        %v381 = vld [vmem:[#allocation5 + $0x8] sm:$0xff]
        %v382 = vld [vmem:[#allocation5 + $0x10] sm:$0xff]
        %v383 = vld [vmem:[#allocation5 + $0x18] sm:$0xff]
        %v384 = vld [vmem:[#allocation5 + $0x20] sm:$0xff]
        %v385 = vld [vmem:[#allocation5 + $0x28] sm:$0xff]
        %v386 = vld [vmem:[#allocation5 + $0x30] sm:$0xff]
        %v387 = vld [vmem:[#allocation5 + $0x38] sm:$0xff]
        %s388 = scalar_lea.vmem [#allocation5], 64
        %v389 = vld [vmem:[%s388] sm:$0xff]
        %v390 = vld [vmem:[%s388 + $0x8] sm:$0xff]
        %v391 = vld [vmem:[%s388 + $0x10] sm:$0xff]
        %v392 = vld [vmem:[%s388 + $0x18] sm:$0xff]
        %v393 = vld [vmem:[%s388 + $0x20] sm:$0xff]
        %v394 = vld [vmem:[%s388 + $0x28] sm:$0xff]
        %v395 = vld [vmem:[%s388 + $0x30] sm:$0xff]
        %v396 = vld [vmem:[%s388 + $0x38] sm:$0xff]
        %vm399 = vcmask 1046528
        %v400 = vrot.slane %v378, 1
        %v401 = vrot.slane %v375, 1
        %v402 = vsel %vm399, %v400, %v401
        %v403 = vrot.slane %v379, 1
        %v404 = vsel %vm399, %v401, %v403
        %v405 = vsel %vm342, %v402, 0
        %v407 = vsel %vm342, %v404, 0
        %409 = vmatpush.msra.mxu0 0.0
        %410 = vmatpush.msra.mxu0 0.0
        %411 = vmatpush.msra.mxu0 0.0
        %412 = vmatpush.msra.mxu0 0.0
        %413 = vmatpush.msra.mxu0 0.0
        %414 = vmatpush.msra.mxu0 0.0
        %415 = vmatpush.msra.mxu0 0.0
        %416 = vmatpush.msra.mxu0 0.0
        %417 = vmatpush.msra.mxu0 %v396
        %418 = vmatpush.msra.mxu0 %v395
        %419 = vmatpush.msra.mxu0 %v394
        %420 = vmatpush.msra.mxu0 %v393
        %421 = vmatpush.msra.mxu0 %v392
        %422 = vmatpush.msra.mxu0 %v391
        %423 = vmatpush.msra.mxu0 %v390
        %424 = vmatpush.msra.mxu0 %v389
        %425 = vmatmul.f32.gmra.mxu0 %v405
        %v426 = vpop.f32.mrf.mxu0
        %v427 = vadd.f32 0.0, %v426
        %428 = vmatmul.f32.gmra.mxu0 %v407
        %v429 = vpop.f32.mrf.mxu0
        %v430 = vadd.f32 0.0, %v429
        %431 = vdwg.mxu0
        %v432 = vsel %vm342, %v378, 0
        %v434 = vsel %vm342, %v375, 0
        %436 = vmatpush.msra.mxu0 0.0
        %437 = vmatpush.msra.mxu0 0.0
        %438 = vmatpush.msra.mxu0 0.0
        %439 = vmatpush.msra.mxu0 0.0
        %440 = vmatpush.msra.mxu0 0.0
        %441 = vmatpush.msra.mxu0 0.0
        %442 = vmatpush.msra.mxu0 0.0
        %443 = vmatpush.msra.mxu0 0.0
        %444 = vmatpush.msra.mxu0 %v387
        %445 = vmatpush.msra.mxu0 %v386
        %446 = vmatpush.msra.mxu0 %v385
        %447 = vmatpush.msra.mxu0 %v384
        %448 = vmatpush.msra.mxu0 %v383
        %449 = vmatpush.msra.mxu0 %v382
        %450 = vmatpush.msra.mxu0 %v381
        %451 = vmatpush.msra.mxu0 %v380
        %452 = vmatmul.f32.gmra.mxu0 %v432
        %v453 = vpop.f32.mrf.mxu0
        %v454 = vadd.f32 %v427, %v453
        %455 = vmatmul.f32.gmra.mxu0 %v434
        %v456 = vpop.f32.mrf.mxu0
        %v457 = vadd.f32 %v430, %v456
        %458 = vdwg.mxu0
        %s459 = scalar_lea.vmem [#allocation5], 128
        %v460 = vld [vmem:[%s459] sm:$0xff]
        %v461 = vld [vmem:[%s459 + $0x8] sm:$0xff]
        %v462 = vld [vmem:[%s459 + $0x10] sm:$0xff]
        %v463 = vld [vmem:[%s459 + $0x18] sm:$0xff]
        %v464 = vld [vmem:[%s459 + $0x20] sm:$0xff]
        %v465 = vld [vmem:[%s459 + $0x28] sm:$0xff]
        %v466 = vld [vmem:[%s459 + $0x30] sm:$0xff]
        %v467 = vld [vmem:[%s459 + $0x38] sm:$0xff]
        %vm468 = vcmask 1045504
        %v469 = vrot.slane %v378, 2
        %v470 = vrot.slane %v375, 2
        %v471 = vsel %vm468, %v469, %v470
        %v472 = vrot.slane %v379, 2
        %v473 = vsel %vm468, %v470, %v472
        %v474 = vsel %vm342, %v471, 0
        %v476 = vsel %vm342, %v473, 0
        %478 = vmatpush.msra.mxu0 0.0
        %479 = vmatpush.msra.mxu0 0.0
        %480 = vmatpush.msra.mxu0 0.0
        %481 = vmatpush.msra.mxu0 0.0
        %482 = vmatpush.msra.mxu0 0.0
        %483 = vmatpush.msra.mxu0 0.0
        %484 = vmatpush.msra.mxu0 0.0
        %485 = vmatpush.msra.mxu0 0.0
        %486 = vmatpush.msra.mxu0 %v467
        %487 = vmatpush.msra.mxu0 %v466
        %488 = vmatpush.msra.mxu0 %v465
        %489 = vmatpush.msra.mxu0 %v464
        %490 = vmatpush.msra.mxu0 %v463
        %491 = vmatpush.msra.mxu0 %v462
        %492 = vmatpush.msra.mxu0 %v461
        %493 = vmatpush.msra.mxu0 %v460
        %494 = vmatmul.f32.gmra.mxu0 %v474
        %v495 = vpop.f32.mrf.mxu0
        %v496 = vadd.f32 0.0, %v495
        %497 = vmatmul.f32.gmra.mxu0 %v476
        %v498 = vpop.f32.mrf.mxu0
        %v499 = vadd.f32 0.0, %v498
        %500 = vdwg.mxu0
        %v501 = vadd.f32 %v454, %v496
        %v502 = vadd.f32 %v457, %v499
        %v503 = vld [vmem:[%s5] sm:$0x1]
        %v504 = vperm.slane %v503, 0
        %v505 = vmul.f32 %v501, %v504
        %v506 = vmul.f32 %v502, %v504
        %v507 = vld [vmem:[%s5 + $0x1] sm:$0x1]
        %v508 = vperm.slane %v507, 0
        %v509 = vadd.f32 %v505, %v508
        %v510 = vadd.f32 %v506, %v508
        %v511 = vmax.f32 %v509, 0.0
        %v512 = vmax.f32 %v510, 0.0
        %v515 = vrot.slane %v511, 7
        %v516 = vrot.slane %v512, 7
        %v517 = vsel %vm372, %v515, %v516
        %v521 = vsel %vm372, 0.0, %v515
        %v522 = vsel %vm372, %v516, 0.0
        %v523 = vld [vmem:[#allocation7] sm:$0xff]
        %v524 = vld [vmem:[#allocation7 + $0x8] sm:$0xff]
        %v525 = vld [vmem:[#allocation7 + $0x10] sm:$0xff]
        %v526 = vld [vmem:[#allocation7 + $0x18] sm:$0xff]
        %v527 = vld [vmem:[#allocation7 + $0x20] sm:$0xff]
        %v528 = vld [vmem:[#allocation7 + $0x28] sm:$0xff]
        %v529 = vld [vmem:[#allocation7 + $0x30] sm:$0xff]
        %v530 = vld [vmem:[#allocation7 + $0x38] sm:$0xff]
        %v531 = vld [vmem:[#allocation7 + $0x40] sm:$0xff]
        %v532 = vld [vmem:[#allocation7 + $0x48] sm:$0xff]
        %v533 = vld [vmem:[#allocation7 + $0x50] sm:$0xff]
        %v534 = vld [vmem:[#allocation7 + $0x58] sm:$0xff]
        %v535 = vld [vmem:[#allocation7 + $0x60] sm:$0xff]
        %v536 = vld [vmem:[#allocation7 + $0x68] sm:$0xff]
        %v537 = vld [vmem:[#allocation7 + $0x70] sm:$0xff]
        %v538 = vld [vmem:[#allocation7 + $0x78] sm:$0xff]
        %s539 = scalar_lea.vmem [#allocation7], 128
        %v540 = vld [vmem:[%s539] sm:$0xff]
        %v541 = vld [vmem:[%s539 + $0x8] sm:$0xff]
        %v542 = vld [vmem:[%s539 + $0x10] sm:$0xff]
        %v543 = vld [vmem:[%s539 + $0x18] sm:$0xff]
        %v544 = vld [vmem:[%s539 + $0x20] sm:$0xff]
        %v545 = vld [vmem:[%s539 + $0x28] sm:$0xff]
        %v546 = vld [vmem:[%s539 + $0x30] sm:$0xff]
        %v547 = vld [vmem:[%s539 + $0x38] sm:$0xff]
        %v548 = vld [vmem:[%s539 + $0x40] sm:$0xff]
        %v549 = vld [vmem:[%s539 + $0x48] sm:$0xff]
        %v550 = vld [vmem:[%s539 + $0x50] sm:$0xff]
        %v551 = vld [vmem:[%s539 + $0x58] sm:$0xff]
        %v552 = vld [vmem:[%s539 + $0x60] sm:$0xff]
        %v553 = vld [vmem:[%s539 + $0x68] sm:$0xff]
        %v554 = vld [vmem:[%s539 + $0x70] sm:$0xff]
        %v555 = vld [vmem:[%s539 + $0x78] sm:$0xff]
        %v558 = vrot.slane %v521, 1
        %v559 = vrot.slane %v517, 1
        %v560 = vsel %vm399, %v558, %v559
        %v561 = vrot.slane %v522, 1
        %v562 = vsel %vm399, %v559, %v561
        %565 = vmatpush.msra.mxu0 %v555
        %566 = vmatpush.msra.mxu0 %v554
        %567 = vmatpush.msra.mxu0 %v553
        %568 = vmatpush.msra.mxu0 %v552
        %569 = vmatpush.msra.mxu0 %v551
        %570 = vmatpush.msra.mxu0 %v550
        %571 = vmatpush.msra.mxu0 %v549
        %572 = vmatpush.msra.mxu0 %v548
        %573 = vmatpush.msra.mxu0 %v547
        %574 = vmatpush.msra.mxu0 %v546
        %575 = vmatpush.msra.mxu0 %v545
        %576 = vmatpush.msra.mxu0 %v544
        %577 = vmatpush.msra.mxu0 %v543
        %578 = vmatpush.msra.mxu0 %v542
        %579 = vmatpush.msra.mxu0 %v541
        %580 = vmatpush.msra.mxu0 %v540
        %581 = vmatmul.f32.gmra.mxu0 %v560
        %v582 = vpop.f32.mrf.mxu0
        %v583 = vadd.f32 0.0, %v582
        %584 = vmatmul.f32.gmra.mxu0 %v562
        %v585 = vpop.f32.mrf.mxu0
        %v586 = vadd.f32 0.0, %v585
        %587 = vdwg.mxu0
        %588 = vmatpush.msra.mxu0 %v538
        %589 = vmatpush.msra.mxu0 %v537
        %590 = vmatpush.msra.mxu0 %v536
        %591 = vmatpush.msra.mxu0 %v535
        %592 = vmatpush.msra.mxu0 %v534
        %593 = vmatpush.msra.mxu0 %v533
        %594 = vmatpush.msra.mxu0 %v532
        %595 = vmatpush.msra.mxu0 %v531
        %596 = vmatpush.msra.mxu0 %v530
        %597 = vmatpush.msra.mxu0 %v529
        %598 = vmatpush.msra.mxu0 %v528
        %599 = vmatpush.msra.mxu0 %v527
        %600 = vmatpush.msra.mxu0 %v526
        %601 = vmatpush.msra.mxu0 %v525
        %602 = vmatpush.msra.mxu0 %v524
        %603 = vmatpush.msra.mxu0 %v523
        %604 = vmatmul.f32.gmra.mxu0 %v521
        %v605 = vpop.f32.mrf.mxu0
        %v606 = vadd.f32 %v583, %v605
        %607 = vmatmul.f32.gmra.mxu0 %v517
        %v608 = vpop.f32.mrf.mxu0
        %v609 = vadd.f32 %v586, %v608
        %610 = vdwg.mxu0
        %s611 = scalar_lea.vmem [#allocation7], 256
        %v612 = vld [vmem:[%s611] sm:$0xff]
        %v613 = vld [vmem:[%s611 + $0x8] sm:$0xff]
        %v614 = vld [vmem:[%s611 + $0x10] sm:$0xff]
        %v615 = vld [vmem:[%s611 + $0x18] sm:$0xff]
        %v616 = vld [vmem:[%s611 + $0x20] sm:$0xff]
        %v617 = vld [vmem:[%s611 + $0x28] sm:$0xff]
        %v618 = vld [vmem:[%s611 + $0x30] sm:$0xff]
        %v619 = vld [vmem:[%s611 + $0x38] sm:$0xff]
        %v620 = vld [vmem:[%s611 + $0x40] sm:$0xff]
        %v621 = vld [vmem:[%s611 + $0x48] sm:$0xff]
        %v622 = vld [vmem:[%s611 + $0x50] sm:$0xff]
        %v623 = vld [vmem:[%s611 + $0x58] sm:$0xff]
        %v624 = vld [vmem:[%s611 + $0x60] sm:$0xff]
        %v625 = vld [vmem:[%s611 + $0x68] sm:$0xff]
        %v626 = vld [vmem:[%s611 + $0x70] sm:$0xff]
        %v627 = vld [vmem:[%s611 + $0x78] sm:$0xff]
        %v628 = vrot.slane %v521, 2
        %v629 = vrot.slane %v517, 2
        %v630 = vsel %vm468, %v628, %v629
        %v631 = vrot.slane %v522, 2
        %v632 = vsel %vm468, %v629, %v631
        %635 = vmatpush.msra.mxu0 %v627
        %636 = vmatpush.msra.mxu0 %v626
        %637 = vmatpush.msra.mxu0 %v625
        %638 = vmatpush.msra.mxu0 %v624
        %639 = vmatpush.msra.mxu0 %v623
        %640 = vmatpush.msra.mxu0 %v622
        %641 = vmatpush.msra.mxu0 %v621
        %642 = vmatpush.msra.mxu0 %v620
        %643 = vmatpush.msra.mxu0 %v619
        %644 = vmatpush.msra.mxu0 %v618
        %645 = vmatpush.msra.mxu0 %v617
        %646 = vmatpush.msra.mxu0 %v616
        %647 = vmatpush.msra.mxu0 %v615
        %648 = vmatpush.msra.mxu0 %v614
        %649 = vmatpush.msra.mxu0 %v613
        %650 = vmatpush.msra.mxu0 %v612
        %651 = vmatmul.f32.gmra.mxu0 %v630
        %v652 = vpop.f32.mrf.mxu0
        %v653 = vadd.f32 0.0, %v652
        %654 = vmatmul.f32.gmra.mxu0 %v632
        %v655 = vpop.f32.mrf.mxu0
        %v656 = vadd.f32 0.0, %v655
        %657 = vdwg.mxu0
        %v658 = vadd.f32 %v606, %v653
        %v659 = vadd.f32 %v609, %v656
        %v660 = vadd.f32 %v658, %v367
        %v661 = vadd.f32 %v659, %v370
        %662 = vst [vmem:[%s321] sm:$0xff] %v660
        %663 = vst [vmem:[%s321 + $0x8] sm:$0xff] %v661
        %s664 = sand.u32 %s164, 1
        %s665 = scalar_lea.sflag [#allocation4], %s664
        %s666 = sand.u32 %s164, 1
        %s667 = smul.addr %s666, 16
        %s668 = scalar_lea.vmem [#allocation10], %s667
        // Predicated region
        $region61: #{tpu_custom_call.1} parent=43 // pred_check
          %p669 = pneg %p174
        $region62: #{tpu_custom_call.1} parent=43 // pred_check_branch
          %671 = sbr.rel (%p669) target = $region64
        $region63: #{tpu_custom_call.1} parent=43 // pred_region
          %673 = vsyncadd %s665, 0
          %s674 = smul.addr %s25, 2
          %s675 = smul.addr %s674, 8
          %s676 = scalar_lea.hbm %s6, %s675
          %s677 = sshll.u32 %s668, 4
          %s678 = int_to_ptr.vmem [resolvable:$true] %s677
          %s679 = sshll.u32 %s676, 4
          %s680 = int_to_ptr.hbm [resolvable:$true] %s679
          %685 = dma.vmem_to_hbm [thread:$0]  %s678, 256, %s680, %s665, 128, 128, 8
        $region64: #{tpu_custom_call.1} parent=43 // pred_fallthru
          _
      $region44: #{tpu_custom_call.1} parent=5 // pred_fallthru
        _
      %p686 = scmp.le.s32.totalorder 2, %s20
      // Predicated region
      $region65: #{tpu_custom_call.1} parent=5 // pred_check
        %p687 = pneg %p686
      $region66: #{tpu_custom_call.1} parent=5 // pred_check_branch
        %689 = sbr.rel (%p687) target = $region68
      $region67: #{tpu_custom_call.1} parent=5 // pred_region
        %s690 = ssub.s32 %s20, 2
        // Predicated region
        $region69: #{tpu_custom_call.1} parent=67 // pred_check
          %p691 = pneg %p180
        $region70: #{tpu_custom_call.1} parent=67 // pred_check_branch
          %693 = sbr.rel (%p691) target = $region72
        $region71: #{tpu_custom_call.1} parent=67 // pred_region
          %s694 = sand.u32 %s165, 1
          %s695 = scalar_lea.sflag [#allocation4], %s694
          %s696 = sand.u32 %s165, 1
          %s697 = smul.addr %s696, 16
          %s698 = scalar_lea.vmem [#allocation10], %s697
          %700 = dma.done %s695, 256
        $region72: #{tpu_custom_call.1} parent=67 // pred_fallthru
          _
      $region68: #{tpu_custom_call.1} parent=5 // pred_fallthru
        _
    $region6: #{tpu_custom_call.1} parent=1 // loop_footer
      %s24 = sadd.s32 1, %s20
    $region7: #{tpu_custom_call.1} parent=1 // loop_footer_branch
      %19 = sbr.rel target = $region3
    $region8: #{tpu_custom_call.1} parent=1 // loop_exit
      _
    %701 = vsyncpa [#allocation3], 1
    %s702 = scalar_lea.sflag [#allocation3], 1
    %703 = vsyncpa %s702, 1
    %704 = vsyncpa [#allocation6], 1
    %705 = vsyncpa [#allocation9], 1
    %706 = vsyncpa [#allocation4], 1
    %s707 = scalar_lea.sflag [#allocation4], 1
    %708 = vsyncpa %s707, 1

</llo_original>
